<compile_context>
chip_gen: v5e
topology: v5e:2x2
jax: 0.10.0
libtpu: 0.0.40
codegen_flags: <defaults>
</compile_context>

<pallas_src>
import warnings

import jax
import jax.numpy as jnp
from jax.experimental import pallas as pl
from jax.experimental.pallas import tpu as pltpu

_LANE = 128
_BN_EPS = 1e-5


def _round_up(x, m):
    return (x + m - 1) // m * m


def _probe_single_buffer_support():
    """True if pl.BlockSpec accepts pipeline_mode=pl.Buffered(1)."""
    if not hasattr(pl, "Buffered"):
        return False
    try:
        pl.BlockSpec((8, 128), lambda i: (0, 0), pipeline_mode=pl.Buffered(1))
        return True
    except TypeError:
        return False


_WEIGHT_BUFFER_COUNT = 1 if _probe_single_buffer_support() else 2
if _WEIGHT_BUFFER_COUNT == 2:
    warnings.warn(
        "pl.Buffered(1) / pipeline_mode not available in this JAX version; "
        "replicated weight blocks will be double-buffered (2x weight VMEM). "
        "The VMEM budget accounts for this, but prefer a newer JAX.",
        RuntimeWarning)


def _vmem_capacity_bytes():
    """Physical per-core VMEM; conservative 64 MiB (v7x) if the query fails."""
    try:
        info = pltpu.get_tpu_info()
        cap = getattr(info, "vmem_capacity_bytes", None)
        if cap:
            return int(cap)
    except Exception:
        pass
    return 64 * 1024 * 1024


# ----------------------------------------------------------------------------
# Kernel: one batch tile of the full 5-layer MLP (folded fc+BN, LeakyReLU 0.2).
# ----------------------------------------------------------------------------
def mlp_kernel(x_ref,
               w1_ref, b1_ref,
               w2_ref, b2_ref,
               w3_ref, b3_ref,
               w4_ref, b4_ref,
               wo_ref, bo_ref,
               out_ref):

    def layer(h, w_ref, b_ref, activate=True):
        # bf16 (or f32) operands on the MXU, f32 accumulation.
        y = jnp.dot(h.astype(w_ref.dtype), w_ref[...],
                    preferred_element_type=jnp.float32)
        y = y + b_ref[...]                  # folded bias + BN shift (f32)
        if activate:
            y = jnp.maximum(y, 0.2 * y)     # LeakyReLU(0.2): single vmax
        return y

    h = x_ref[...]                          # already in matmul dtype
    h = layer(h, w1_ref, b1_ref)
    # dropout1/2/3 are identity in eval mode.
    h = layer(h, w2_ref, b2_ref)
    h = layer(h, w3_ref, b3_ref)
    h = layer(h, w4_ref, b4_ref)
    out = layer(h, wo_ref, bo_ref, activate=False)
    out_ref[...] = out.astype(out_ref.dtype)


def _replicated_spec(shape):
    """Weights/biases are identical for every batch tile: constant index_map,
    single-buffered when supported (no benefit from a second buffer)."""
    index_map = lambda i: (0,) * len(shape)
    if _WEIGHT_BUFFER_COUNT == 1:
        return pl.BlockSpec(shape, index_map, pipeline_mode=pl.Buffered(1))
    return pl.BlockSpec(shape, index_map)


def _fold_layer(w, b, g, be, rm, rv, weight_dtype):
    """Fold eval-mode BatchNorm + linear bias into (weight, shift)."""
    scale = g / jnp.sqrt(rv + _BN_EPS)                 # (H,)
    shift = be - rm * scale                            # (H,)
    w_f = (w * scale[None, :]).astype(weight_dtype)    # column scale
    b_f = (b * scale + shift).reshape(1, -1).astype(jnp.float32)
    return w_f, b_f


def rafdb_smirk_forward(emoca_features, params, *, max_block_b=None,
                        weight_dtype=jnp.bfloat16):
    """emoca_features: (B, Din) f32. Returns expression logits (B, 7)."""
    emoca_features = jnp.asarray(emoca_features, jnp.float32)
    B, Din = emoca_features.shape
    H = params["w1"].shape[1]
    Dout = params["wo"].shape[1]
    Do_p = _round_up(Dout, _LANE)        # lane-dense output (unmasked stores)

    vmem_cap = _vmem_capacity_bytes()
    if max_block_b is None:
        # 128 MiB parts (v5e/v6e) afford a bigger batch tile; 64 MiB (v7x) -> 256.
        max_block_b = 512 if vmem_cap >= 96 * 1024 * 1024 else 256

    if B <= max_block_b:                 # tiny batch: one grid step
        block_b = B                      # block dim == full array dim -> legal
    else:
        block_b = max_block_b
    B_p = _round_up(B, block_b)
    grid = (B_p // block_b,)

    # x keeps its true feature width (no lane-padding copy); cast to the matmul
    # dtype here so layer 1 needs no in-kernel cast and the tile DMA is halved.
    x = emoca_features.astype(weight_dtype)
    if B_p != B:                         # pad batch rows only when needed
        x = jnp.pad(x, ((0, B_p - B), (0, 0)))

    # ---- fold bias + BatchNorm into weights (plain JAX glue) -----------------
    w1, b1 = _fold_layer(params["w1"], params["b1"], params["g1"],
                         params["be1"], params["rm1"], params["rv1"], weight_dtype)
    w2, b2 = _fold_layer(params["w2"], params["b2"], params["g2"],
                         params["be2"], params["rm2"], params["rv2"], weight_dtype)
    w3, b3 = _fold_layer(params["w3"], params["b3"], params["g3"],
                         params["be3"], params["rm3"], params["rv3"], weight_dtype)
    w4, b4 = _fold_layer(params["w4"], params["b4"], params["g4"],
                         params["be4"], params["rm4"], params["rv4"], weight_dtype)

    wo = params["wo"].astype(weight_dtype)
    bo = params["bo"].reshape(1, -1).astype(jnp.float32)
    if Do_p != Dout:                     # zero-padded output columns
        wo = jnp.pad(wo, ((0, 0), (0, Do_p - Dout)))
        bo = jnp.pad(bo, ((0, 0), (0, Do_p - Dout)))

    # ---- BlockSpecs ----------------------------------------------------------
    in_specs = [
        pl.BlockSpec((block_b, Din), lambda i: (i, 0)),           # x tile
        _replicated_spec((Din, H)),  _replicated_spec((1, H)),    # layer 1
        _replicated_spec((H, H)),    _replicated_spec((1, H)),    # layer 2
        _replicated_spec((H, H)),    _replicated_spec((1, H)),    # layer 3
        _replicated_spec((H, H)),    _replicated_spec((1, H)),    # layer 4
        _replicated_spec((H, Do_p)), _replicated_spec((1, Do_p)),  # output
    ]
    out_spec = pl.BlockSpec((block_b, Do_p), lambda i: (i, 0))

    # ---- explicit VMEM budget (clamped to physical capacity) -----------------
    w_isz = jnp.dtype(weight_dtype).itemsize
    x_isz = jnp.dtype(x.dtype).itemsize
    weight_bytes = w_isz * (Din * H + 3 * H * H + H * Do_p)
    bias_bytes = 4 * (4 * H + Do_p)
    resident_bytes = _WEIGHT_BUFFER_COUNT * (weight_bytes + bias_bytes)
    stream_bytes = 2 * block_b * (Din * x_isz + Do_p * 4)   # double-buffered x/out
    temp_bytes = 2 * 4 * block_b * H                        # live f32 activation temps
    footprint = resident_bytes + stream_bytes + temp_bytes

    headroom = 4 * 1024 * 1024
    hard_cap = vmem_cap - headroom
    if footprint > hard_cap:
        # TODO(synk): implement per-layer weight streaming (memory_space=pl.ANY
        # + double-buffered make_async_copy) for this case instead of raising.
        raise ValueError(
            f"Resident-weight MLP footprint {footprint / 2**20:.1f} MiB exceeds "
            f"usable VMEM {hard_cap / 2**20:.1f} MiB. Use weight_dtype=bfloat16 "
            "and/or a smaller max_block_b (weight streaming not implemented).")
    vmem_limit = int(min(max(footprint + 8 * 1024 * 1024, 32 * 1024 * 1024),
                         hard_cap))

    # Shard the batch axis across TensorCores only when each core gets several
    # grid steps; otherwise the duplicated weight DMA (VMEM is per-TC) loses.
    dim_sem = ("parallel",) if grid[0] >= 4 else ("arbitrary",)

    out = pl.pallas_call(
        mlp_kernel,
        out_shape=jax.ShapeDtypeStruct((B_p, Do_p), jnp.float32),
        grid_spec=pltpu.PrefetchScalarGridSpec(
            num_scalar_prefetch=0,
            grid=grid,
            in_specs=in_specs,
            out_specs=out_spec,
        ),
        compiler_params=pltpu.CompilerParams(
            dimension_semantics=dim_sem,
            vmem_limit_bytes=vmem_limit),
    )(
        x,
        w1, b1,
        w2, b2,
        w3, b3,
        w4, b4,
        wo, bo,
    )

    # output[:, :7] — expression; arousal/valence (cols 8, 9) are unused.
    return out[:B, :7]


# ----------------------------------------------------------------------------
# Parameter construction + pure-JAX references for correctness checks.
# ----------------------------------------------------------------------------
def init_params(key, input_size, hidden_size, output_size):
    """Deterministic synthetic parameters matching the PyTorch module shapes."""
    keys = jax.random.split(key, 32)
    k = iter(keys)

    def lin(din, dout):
        w = jax.random.normal(next(k), (din, dout), jnp.float32) * (1.0 / jnp.sqrt(din))
        b = jax.random.normal(next(k), (dout,), jnp.float32) * 0.01
        return w, b

    def bn(d):
        gamma = 1.0 + 0.1 * jax.random.normal(next(k), (d,), jnp.float32)
        beta = 0.05 * jax.random.normal(next(k), (d,), jnp.float32)
        rm = 0.1 * jax.random.normal(next(k), (d,), jnp.float32)
        rv = 0.5 + jax.random.uniform(next(k), (d,), jnp.float32)   # > 0
        return gamma, beta, rm, rv

    p = {}
    p["w1"], p["b1"] = lin(input_size, hidden_size)
    p["g1"], p["be1"], p["rm1"], p["rv1"] = bn(hidden_size)
    p["w2"], p["b2"] = lin(hidden_size, hidden_size)
    p["g2"], p["be2"], p["rm2"], p["rv2"] = bn(hidden_size)
    p["w3"], p["b3"] = lin(hidden_size, hidden_size)
    p["g3"], p["be3"], p["rm3"], p["rv3"] = bn(hidden_size)
    p["w4"], p["b4"] = lin(hidden_size, hidden_size)
    p["g4"], p["be4"], p["rm4"], p["rv4"] = bn(hidden_size)
    p["wo"], p["bo"] = lin(hidden_size, output_size)
    return p


def reference_forward(emoca_features, params):
    """Pure-JAX f32 reference with un-fused BN (exact module semantics)."""
    def layer(h, w, b, g, be, rm, rv):
        y = h @ w + b
        y = (y - rm) / jnp.sqrt(rv + _BN_EPS) * g + be
        return jnp.where(y >= 0, y, 0.2 * y)

    h = layer(emoca_features, params["w1"], params["b1"], params["g1"],
              params["be1"], params["rm1"], params["rv1"])
    h = layer(h, params["w2"], params["b2"], params["g2"],
              params["be2"], params["rm2"], params["rv2"])
    h = layer(h, params["w3"], params["b3"], params["g3"],
              params["be3"], params["rm3"], params["rv3"])
    h = layer(h, params["w4"], params["b4"], params["g4"],
              params["be4"], params["rm4"], params["rv4"])
    out = h @ params["wo"] + params["bo"]
    return out[:, :7]


def reference_forward_low_precision(emoca_features, params, weight_dtype):
    """Pure-JAX reference mirroring the kernel's folded-BN / low-precision math."""
    h = emoca_features.astype(jnp.float32)
    for i in ("1", "2", "3", "4"):
        w, b = _fold_layer(params["w" + i], params["b" + i], params["g" + i],
                           params["be" + i], params["rm" + i], params["rv" + i],
                           weight_dtype)
        y = jnp.dot(h.astype(weight_dtype), w,
                    preferred_element_type=jnp.float32) + b
        h = jnp.maximum(y, 0.2 * y)
    out = jnp.dot(h.astype(weight_dtype), params["wo"].astype(weight_dtype),
                  preferred_element_type=jnp.float32) + params["bo"]
    return out[:, :7]


if __name__ == "__main__":
    # Small shapes consistent with the module (scaled down from 353/2048/10).
    B = 16
    INPUT_SIZE = 64      # total emoca feature dim (sum over dict keys)
    HIDDEN = 128
    OUTPUT = 10          # >= 10 so the [:, :7] / [:, 8] / [:, 9] slicing is valid

    key = jax.random.PRNGKey(0)
    k_params, k_a, k_b, k_c = jax.random.split(key, 4)

    # Synthetic `emoca_feature` dict of lists of per-sample features, then the
    # torch.stack(dim=1) + torch.cat(dim=1) glue reproduced in JAX.
    feat_split = {"expression": 32, "shape": 16, "pose": 16}   # sums to INPUT_SIZE
    feat_keys = {"expression": k_a, "shape": k_b, "pose": k_c}
    emoca_feature = {
        name: [jax.random.normal(jax.random.fold_in(feat_keys[name], j), (B,),
                                 jnp.float32)
               for j in range(n)]
        for name, n in feat_split.items()
    }
    emoca_features_list = [
        jnp.stack([f.astype(jnp.float32) for f in emoca_feature[name]], axis=1)
        for name in emoca_feature
    ]
    emoca_features = jnp.concatenate(emoca_features_list, axis=1)  # (B, INPUT_SIZE)
    assert emoca_features.shape == (B, INPUT_SIZE)

    params = init_params(k_params, INPUT_SIZE, HIDDEN, OUTPUT)

    # Default (performance) config: bf16 weights/activations, f32 accumulation.
    expr_bf16 = rafdb_smirk_forward(emoca_features, params)
    expr_bf16 = jax.block_until_ready(expr_bf16)
    assert expr_bf16.shape == (B, 7), expr_bf16.shape
    ref_bf16 = reference_forward_low_precision(emoca_features, params, jnp.bfloat16)
    assert jnp.allclose(expr_bf16, ref_bf16, atol=1e-2, rtol=1e-2), (
        float(jnp.max(jnp.abs(expr_bf16 - ref_bf16))))

    # Full-precision config checked against the un-fused module reference
    # (tolerance covers the MXU's default f32 matmul precision on either side).
    expr_f32 = rafdb_smirk_forward(emoca_features, params,
                                   weight_dtype=jnp.float32)
    expr_f32 = jax.block_until_ready(expr_f32)
    ref_f32 = reference_forward(emoca_features, params)
    assert expr_f32.shape == (B, 7), expr_f32.shape
    assert jnp.allclose(expr_f32, ref_f32, atol=3e-2, rtol=3e-2), (
        float(jnp.max(jnp.abs(expr_f32 - ref_f32))))

    print("KERNEL_OK")
</pallas_src>

<mosaic_0001>
module attributes {stable_mosaic.version = 11 : i64} {
  func.func @mlp_kernel(%arg0: i32, %arg1: memref<16x64xbf16, #tpu.memory_space<vmem>>, %arg2: memref<64x128xbf16, #tpu.memory_space<vmem>>, %arg3: memref<1x128xf32, #tpu.memory_space<vmem>>, %arg4: memref<128x128xbf16, #tpu.memory_space<vmem>>, %arg5: memref<1x128xf32, #tpu.memory_space<vmem>>, %arg6: memref<128x128xbf16, #tpu.memory_space<vmem>>, %arg7: memref<1x128xf32, #tpu.memory_space<vmem>>, %arg8: memref<128x128xbf16, #tpu.memory_space<vmem>>, %arg9: memref<1x128xf32, #tpu.memory_space<vmem>>, %arg10: memref<128x128xbf16, #tpu.memory_space<vmem>>, %arg11: memref<1x128xf32, #tpu.memory_space<vmem>>, %arg12: memref<16x128xf32, #tpu.memory_space<vmem>>) attributes {dimension_semantics = [#tpu.dimension_semantics<arbitrary>], iteration_bounds = array<i64: 1>, scalar_prefetch = 0 : i64, scratch_operands = 0 : i64, tpu.core_type = #tpu.core_type<tc>, window_params = [{transform_indices = @transform_0, window_bounds = array<i64: 16, 64>}, {pipeline_mode = #tpu.pipeline_mode<synchronous>, transform_indices = @transform_1, window_bounds = array<i64: 64, 128>}, {pipeline_mode = #tpu.pipeline_mode<synchronous>, transform_indices = @transform_2, window_bounds = array<i64: 1, 128>}, {pipeline_mode = #tpu.pipeline_mode<synchronous>, transform_indices = @transform_3, window_bounds = array<i64: 128, 128>}, {pipeline_mode = #tpu.pipeline_mode<synchronous>, transform_indices = @transform_4, window_bounds = array<i64: 1, 128>}, {pipeline_mode = #tpu.pipeline_mode<synchronous>, transform_indices = @transform_5, window_bounds = array<i64: 128, 128>}, {pipeline_mode = #tpu.pipeline_mode<synchronous>, transform_indices = @transform_6, window_bounds = array<i64: 1, 128>}, {pipeline_mode = #tpu.pipeline_mode<synchronous>, transform_indices = @transform_7, window_bounds = array<i64: 128, 128>}, {pipeline_mode = #tpu.pipeline_mode<synchronous>, transform_indices = @transform_8, window_bounds = array<i64: 1, 128>}, {pipeline_mode = #tpu.pipeline_mode<synchronous>, transform_indices = @transform_9, window_bounds = array<i64: 128, 128>}, {pipeline_mode = #tpu.pipeline_mode<synchronous>, transform_indices = @transform_10, window_bounds = array<i64: 1, 128>}, {transform_indices = @transform_11, window_bounds = array<i64: 16, 128>}]} {
    %c0 = arith.constant 0 : index
    %c0_0 = arith.constant 0 : index
    %0 = vector.load %arg1[%c0, %c0_0] : memref<16x64xbf16, #tpu.memory_space<vmem>>, vector<16x64xbf16>
    %c0_1 = arith.constant 0 : index
    %c0_2 = arith.constant 0 : index
    %1 = vector.load %arg2[%c0_1, %c0_2] : memref<64x128xbf16, #tpu.memory_space<vmem>>, vector<64x128xbf16>
    %cst = arith.constant dense<0.000000e+00> : vector<16x128xf32>
    %2 = tpu.matmul %0, %1, %cst {dimension_numbers = #tpu.dot_dimension_numbers<[1], [0], [0], [1], [0, 0, 1, 1], [], []>} : vector<16x64xbf16>, vector<64x128xbf16>, vector<16x128xf32> -> vector<16x128xf32>
    %c0_3 = arith.constant 0 : index
    %c0_4 = arith.constant 0 : index
    %3 = vector.load %arg3[%c0_3, %c0_4] : memref<1x128xf32, #tpu.memory_space<vmem>>, vector<1x128xf32>
    %4 = vector.broadcast %3 : vector<1x128xf32> to vector<16x128xf32>
    %5 = arith.addf %2, %4 : vector<16x128xf32>
    %cst_5 = arith.constant 2.000000e-01 : f32
    %6 = vector.broadcast %cst_5 : f32 to vector<16x128xf32>
    %7 = arith.mulf %6, %5 : vector<16x128xf32>
    %8 = arith.maximumf %5, %7 : vector<16x128xf32>
    %9 = arith.truncf %8 : vector<16x128xf32> to vector<16x128xbf16>
    %c0_6 = arith.constant 0 : index
    %c0_7 = arith.constant 0 : index
    %10 = vector.load %arg4[%c0_6, %c0_7] : memref<128x128xbf16, #tpu.memory_space<vmem>>, vector<128x128xbf16>
    %cst_8 = arith.constant dense<0.000000e+00> : vector<16x128xf32>
    %11 = tpu.matmul %9, %10, %cst_8 {dimension_numbers = #tpu.dot_dimension_numbers<[1], [0], [0], [1], [0, 0, 1, 1], [], []>} : vector<16x128xbf16>, vector<128x128xbf16>, vector<16x128xf32> -> vector<16x128xf32>
    %c0_9 = arith.constant 0 : index
    %c0_10 = arith.constant 0 : index
    %12 = vector.load %arg5[%c0_9, %c0_10] : memref<1x128xf32, #tpu.memory_space<vmem>>, vector<1x128xf32>
    %13 = vector.broadcast %12 : vector<1x128xf32> to vector<16x128xf32>
    %14 = arith.addf %11, %13 : vector<16x128xf32>
    %cst_11 = arith.constant 2.000000e-01 : f32
    %15 = vector.broadcast %cst_11 : f32 to vector<16x128xf32>
    %16 = arith.mulf %15, %14 : vector<16x128xf32>
    %17 = arith.maximumf %14, %16 : vector<16x128xf32>
    %18 = arith.truncf %17 : vector<16x128xf32> to vector<16x128xbf16>
    %c0_12 = arith.constant 0 : index
    %c0_13 = arith.constant 0 : index
    %19 = vector.load %arg6[%c0_12, %c0_13] : memref<128x128xbf16, #tpu.memory_space<vmem>>, vector<128x128xbf16>
    %cst_14 = arith.constant dense<0.000000e+00> : vector<16x128xf32>
    %20 = tpu.matmul %18, %19, %cst_14 {dimension_numbers = #tpu.dot_dimension_numbers<[1], [0], [0], [1], [0, 0, 1, 1], [], []>} : vector<16x128xbf16>, vector<128x128xbf16>, vector<16x128xf32> -> vector<16x128xf32>
    %c0_15 = arith.constant 0 : index
    %c0_16 = arith.constant 0 : index
    %21 = vector.load %arg7[%c0_15, %c0_16] : memref<1x128xf32, #tpu.memory_space<vmem>>, vector<1x128xf32>
    %22 = vector.broadcast %21 : vector<1x128xf32> to vector<16x128xf32>
    %23 = arith.addf %20, %22 : vector<16x128xf32>
    %cst_17 = arith.constant 2.000000e-01 : f32
    %24 = vector.broadcast %cst_17 : f32 to vector<16x128xf32>
    %25 = arith.mulf %24, %23 : vector<16x128xf32>
    %26 = arith.maximumf %23, %25 : vector<16x128xf32>
    %27 = arith.truncf %26 : vector<16x128xf32> to vector<16x128xbf16>
    %c0_18 = arith.constant 0 : index
    %c0_19 = arith.constant 0 : index
    %28 = vector.load %arg8[%c0_18, %c0_19] : memref<128x128xbf16, #tpu.memory_space<vmem>>, vector<128x128xbf16>
    %cst_20 = arith.constant dense<0.000000e+00> : vector<16x128xf32>
    %29 = tpu.matmul %27, %28, %cst_20 {dimension_numbers = #tpu.dot_dimension_numbers<[1], [0], [0], [1], [0, 0, 1, 1], [], []>} : vector<16x128xbf16>, vector<128x128xbf16>, vector<16x128xf32> -> vector<16x128xf32>
    %c0_21 = arith.constant 0 : index
    %c0_22 = arith.constant 0 : index
    %30 = vector.load %arg9[%c0_21, %c0_22] : memref<1x128xf32, #tpu.memory_space<vmem>>, vector<1x128xf32>
    %31 = vector.broadcast %30 : vector<1x128xf32> to vector<16x128xf32>
    %32 = arith.addf %29, %31 : vector<16x128xf32>
    %cst_23 = arith.constant 2.000000e-01 : f32
    %33 = vector.broadcast %cst_23 : f32 to vector<16x128xf32>
    %34 = arith.mulf %33, %32 : vector<16x128xf32>
    %35 = arith.maximumf %32, %34 : vector<16x128xf32>
    %36 = arith.truncf %35 : vector<16x128xf32> to vector<16x128xbf16>
    %c0_24 = arith.constant 0 : index
    %c0_25 = arith.constant 0 : index
    %37 = vector.load %arg10[%c0_24, %c0_25] : memref<128x128xbf16, #tpu.memory_space<vmem>>, vector<128x128xbf16>
    %cst_26 = arith.constant dense<0.000000e+00> : vector<16x128xf32>
    %38 = tpu.matmul %36, %37, %cst_26 {dimension_numbers = #tpu.dot_dimension_numbers<[1], [0], [0], [1], [0, 0, 1, 1], [], []>} : vector<16x128xbf16>, vector<128x128xbf16>, vector<16x128xf32> -> vector<16x128xf32>
    %c0_27 = arith.constant 0 : index
    %c0_28 = arith.constant 0 : index
    %39 = vector.load %arg11[%c0_27, %c0_28] : memref<1x128xf32, #tpu.memory_space<vmem>>, vector<1x128xf32>
    %40 = vector.broadcast %39 : vector<1x128xf32> to vector<16x128xf32>
    %41 = arith.addf %38, %40 : vector<16x128xf32>
    %c0_29 = arith.constant 0 : index
    %c0_30 = arith.constant 0 : index
    %42 = vector.load %arg12[%c0_29, %c0_30] : memref<16x128xf32, #tpu.memory_space<vmem>>, vector<16x128xf32>
    tpu.vector_store %arg12[%c0_29, %c0_30], %41 {strides = array<i32>} : memref<16x128xf32, #tpu.memory_space<vmem>>, vector<16x128xf32>,
    return
  }
  func.func @transform_0(%arg0: i32) -> (i32, i32) {
    %c0_i32 = arith.constant 0 : i32
    %c0_i32_0 = arith.constant 0 : i32
    return %arg0, %c0_i32 : i32, i32
  }
  func.func @transform_1(%arg0: i32) -> (i32, i32) {
    %c0_i32 = arith.constant 0 : i32
    %c0_i32_0 = arith.constant 0 : i32
    %c0_i32_1 = arith.constant 0 : i32
    return %c0_i32, %c0_i32_0 : i32, i32
  }
  func.func @transform_2(%arg0: i32) -> (i32, i32) {
    %c0_i32 = arith.constant 0 : i32
    %c0_i32_0 = arith.constant 0 : i32
    %c0_i32_1 = arith.constant 0 : i32
    return %c0_i32, %c0_i32_0 : i32, i32
  }
  func.func @transform_3(%arg0: i32) -> (i32, i32) {
    %c0_i32 = arith.constant 0 : i32
    %c0_i32_0 = arith.constant 0 : i32
    %c0_i32_1 = arith.constant 0 : i32
    return %c0_i32, %c0_i32_0 : i32, i32
  }
  func.func @transform_4(%arg0: i32) -> (i32, i32) {
    %c0_i32 = arith.constant 0 : i32
    %c0_i32_0 = arith.constant 0 : i32
    %c0_i32_1 = arith.constant 0 : i32
    return %c0_i32, %c0_i32_0 : i32, i32
  }
  func.func @transform_5(%arg0: i32) -> (i32, i32) {
    %c0_i32 = arith.constant 0 : i32
    %c0_i32_0 = arith.constant 0 : i32
    %c0_i32_1 = arith.constant 0 : i32
    return %c0_i32, %c0_i32_0 : i32, i32
  }
  func.func @transform_6(%arg0: i32) -> (i32, i32) {
    %c0_i32 = arith.constant 0 : i32
    %c0_i32_0 = arith.constant 0 : i32
    %c0_i32_1 = arith.constant 0 : i32
    return %c0_i32, %c0_i32_0 : i32, i32
  }
  func.func @transform_7(%arg0: i32) -> (i32, i32) {
    %c0_i32 = arith.constant 0 : i32
    %c0_i32_0 = arith.constant 0 : i32
    %c0_i32_1 = arith.constant 0 : i32
    return %c0_i32, %c0_i32_0 : i32, i32
  }
  func.func @transform_8(%arg0: i32) -> (i32, i32) {
    %c0_i32 = arith.constant 0 : i32
    %c0_i32_0 = arith.constant 0 : i32
    %c0_i32_1 = arith.constant 0 : i32
    return %c0_i32, %c0_i32_0 : i32, i32
  }
  func.func @transform_9(%arg0: i32) -> (i32, i32) {
    %c0_i32 = arith.constant 0 : i32
    %c0_i32_0 = arith.constant 0 : i32
    %c0_i32_1 = arith.constant 0 : i32
    return %c0_i32, %c0_i32_0 : i32, i32
  }
  func.func @transform_10(%arg0: i32) -> (i32, i32) {
    %c0_i32 = arith.constant 0 : i32
    %c0_i32_0 = arith.constant 0 : i32
    %c0_i32_1 = arith.constant 0 : i32
    return %c0_i32, %c0_i32_0 : i32, i32
  }
  func.func @transform_11(%arg0: i32) -> (i32, i32) {
    %c0_i32 = arith.constant 0 : i32
    %c0_i32_0 = arith.constant 0 : i32
    return %arg0, %c0_i32 : i32, i32
  }
}

</mosaic_0001>

<llo_original>
// kernel: tpu_custom_call.1
$region0: #{tpu_custom_call.1}
  #allocation0 [shape = 'u32[]', space=smem, size = 0x4, offset = 0x4, fixed_abs, tag = 'smem constant byte address 0x4 - core index']
  #allocation1 [shape = 'u32[72,128]{1,0:T(1,128)}', space=vmem, size = 0x9000, scoped, tag = 'internal scratch']
  %s0 = inlined_call_operand.hbm [shape: bf16[16,64], index: 0, kind: input, shape index: {}]
  %s1 = inlined_call_operand.hbm [shape: bf16[64,128], index: 1, kind: input, shape index: {}]
  %s2 = inlined_call_operand.vmem [shape: f32[1,128], index: 2, kind: input, shape index: {}]
  %s3 = inlined_call_operand.hbm [shape: bf16[128,128], index: 3, kind: input, shape index: {}]
  %s4 = inlined_call_operand.vmem [shape: f32[1,128], index: 4, kind: input, shape index: {}]
  %s5 = inlined_call_operand.hbm [shape: bf16[128,128], index: 5, kind: input, shape index: {}]
  %s6 = inlined_call_operand.vmem [shape: f32[1,128], index: 6, kind: input, shape index: {}]
  %s7 = inlined_call_operand.hbm [shape: bf16[128,128], index: 7, kind: input, shape index: {}]
  %s8 = inlined_call_operand.vmem [shape: f32[1,128], index: 8, kind: input, shape index: {}]
  %s9 = inlined_call_operand.hbm [shape: bf16[128,128], index: 9, kind: input, shape index: {}]
  %s10 = inlined_call_operand.vmem [shape: f32[1,128], index: 10, kind: input, shape index: {}]
  %s11 = inlined_call_operand.hbm [shape: f32[16,128], index: 11, kind: output, shape index: {}]
  %s12 = sld [smem:[#allocation0]]
  $region78: #{tpu_custom_call.1} parent=0
    _
  %s14 = ssub.s32 1, %s12
  %s15 = scalar_select 0, %s14, %s12
  $region1: #{tpu_custom_call.1} parent=0
    #allocation2 [shape = 'u8[4096]{0}', space=vmem, size = 0x1000, scoped, tag = 'input window, operand 0, single buffered']
    #allocation3 [shape = 's32[1]{0}', space=sflag, size = 0x4, scoped, tag = 'scoped memory for tpu_custom_call.1']
    #allocation4 [shape = 's32[1]{0}', space=sflag, size = 0x4, scoped, tag = 'scoped memory for tpu_custom_call.1']
    #allocation5 [shape = 'u8[16384]{0}', space=vmem, size = 0x4000, scoped, tag = 'input window, operand 1, single buffered']
    #allocation6 [shape = 's32[1]{0}', space=sflag, size = 0x4, scoped, tag = 'scoped memory for tpu_custom_call.1']
    #allocation7 [shape = 'u8[32768]{0}', space=vmem, size = 0x8000, scoped, tag = 'input window, operand 3, single buffered']
    #allocation8 [shape = 'u8[32768]{0}', space=vmem, size = 0x8000, scoped, tag = 'input window, operand 5, single buffered']
    #allocation9 [shape = 's32[1]{0}', space=sflag, size = 0x4, scoped, tag = 'scoped memory for tpu_custom_call.1']
    #allocation10 [shape = 'u8[32768]{0}', space=vmem, size = 0x8000, scoped, tag = 'input window, operand 7, single buffered']
    #allocation11 [shape = 'u8[32768]{0}', space=vmem, size = 0x8000, scoped, tag = 'input window, operand 9, single buffered']
    #allocation12 [shape = 's32[1]{0}', space=sflag, size = 0x4, scoped, tag = 'scoped memory for tpu_custom_call.1']
    #allocation13 [shape = 'u8[8192]{0}', space=vmem, size = 0x2000, scoped, tag = 'output window, operand 0, single buffered']
    %16 = vsyncpa [#allocation3], 0
    %17 = vsyncpa [#allocation6], 0
    %18 = vsyncpa [#allocation9], 0
    %19 = vsyncpa [#allocation12], 0
    %20 = vsyncpa [#allocation4], 0
    // Predicated region
    $region2: #{tpu_custom_call.1} parent=1 // pred_check
      _
    $region3: #{tpu_custom_call.1} parent=1 // pred_check_branch
      %22 = sbr.rel (0) target = $region5
    $region4: #{tpu_custom_call.1} parent=1 // pred_region
      %24 = vsyncadd [#allocation3], 0
      %s25 = sshll.u32 %s0, 4
      %s26 = int_to_ptr.hbm [resolvable:$true] %s25
      %s27 = sshll.u32 [#allocation2], 4
      %s28 = int_to_ptr.vmem [resolvable:$true] %s27
      %33 = dma.hbm_to_vmem [thread:$0]  %s26, 128, %s28, [#allocation3], 64, 64, 4
    $region5: #{tpu_custom_call.1} parent=1 // pred_fallthru
      _
    // Predicated region
    $region6: #{tpu_custom_call.1} parent=1 // pred_check
      _
    $region7: #{tpu_custom_call.1} parent=1 // pred_check_branch
      %35 = sbr.rel (0) target = $region9
    $region8: #{tpu_custom_call.1} parent=1 // pred_region
      %37 = vsyncadd [#allocation6], 0
      %s38 = sshll.u32 %s1, 4
      %s39 = int_to_ptr.hbm [resolvable:$true] %s38
      %s40 = sshll.u32 [#allocation5], 4
      %s41 = int_to_ptr.vmem [resolvable:$true] %s40
      %46 = dma.hbm_to_vmem [thread:$0]  %s39, 512, %s41, [#allocation6], 64, 64, 4
    $region9: #{tpu_custom_call.1} parent=1 // pred_fallthru
      _
    // Predicated region
    $region10: #{tpu_custom_call.1} parent=1 // pred_check
      _
    $region11: #{tpu_custom_call.1} parent=1 // pred_check_branch
      %48 = sbr.rel (0) target = $region13
    $region12: #{tpu_custom_call.1} parent=1 // pred_region
      _
    $region13: #{tpu_custom_call.1} parent=1 // pred_fallthru
      _
    // Predicated region
    $region14: #{tpu_custom_call.1} parent=1 // pred_check
      _
    $region15: #{tpu_custom_call.1} parent=1 // pred_check_branch
      %50 = sbr.rel (0) target = $region17
    $region16: #{tpu_custom_call.1} parent=1 // pred_region
      %52 = vsyncadd [#allocation6], 0
      %s53 = sshll.u32 %s3, 4
      %s54 = int_to_ptr.hbm [resolvable:$true] %s53
      %s55 = sshll.u32 [#allocation7], 4
      %s56 = int_to_ptr.vmem [resolvable:$true] %s55
      %61 = dma.hbm_to_vmem [thread:$0]  %s54, 1024, %s56, [#allocation6], 64, 64, 4
    $region17: #{tpu_custom_call.1} parent=1 // pred_fallthru
      _
    // Predicated region
    $region18: #{tpu_custom_call.1} parent=1 // pred_check
      _
    $region19: #{tpu_custom_call.1} parent=1 // pred_check_branch
      %63 = sbr.rel (0) target = $region21
    $region20: #{tpu_custom_call.1} parent=1 // pred_region
      _
    $region21: #{tpu_custom_call.1} parent=1 // pred_fallthru
      _
    // Predicated region
    $region22: #{tpu_custom_call.1} parent=1 // pred_check
      _
    $region23: #{tpu_custom_call.1} parent=1 // pred_check_branch
      %65 = sbr.rel (0) target = $region25
    $region24: #{tpu_custom_call.1} parent=1 // pred_region
      %67 = vsyncadd [#allocation9], 0
      %s68 = sshll.u32 %s5, 4
      %s69 = int_to_ptr.hbm [resolvable:$true] %s68
      %s70 = sshll.u32 [#allocation8], 4
      %s71 = int_to_ptr.vmem [resolvable:$true] %s70
      %76 = dma.hbm_to_vmem [thread:$0]  %s69, 1024, %s71, [#allocation9], 64, 64, 4
    $region25: #{tpu_custom_call.1} parent=1 // pred_fallthru
      _
    // Predicated region
    $region26: #{tpu_custom_call.1} parent=1 // pred_check
      _
    $region27: #{tpu_custom_call.1} parent=1 // pred_check_branch
      %78 = sbr.rel (0) target = $region29
    $region28: #{tpu_custom_call.1} parent=1 // pred_region
      _
    $region29: #{tpu_custom_call.1} parent=1 // pred_fallthru
      _
    // Predicated region
    $region30: #{tpu_custom_call.1} parent=1 // pred_check
      _
    $region31: #{tpu_custom_call.1} parent=1 // pred_check_branch
      %80 = sbr.rel (0) target = $region33
    $region32: #{tpu_custom_call.1} parent=1 // pred_region
      %82 = vsyncadd [#allocation9], 0
      %s83 = sshll.u32 %s7, 4
      %s84 = int_to_ptr.hbm [resolvable:$true] %s83
      %s85 = sshll.u32 [#allocation10], 4
      %s86 = int_to_ptr.vmem [resolvable:$true] %s85
      %91 = dma.hbm_to_vmem [thread:$0]  %s84, 1024, %s86, [#allocation9], 64, 64, 4
    $region33: #{tpu_custom_call.1} parent=1 // pred_fallthru
      _
    // Predicated region
    $region34: #{tpu_custom_call.1} parent=1 // pred_check
      _
    $region35: #{tpu_custom_call.1} parent=1 // pred_check_branch
      %93 = sbr.rel (0) target = $region37
    $region36: #{tpu_custom_call.1} parent=1 // pred_region
      _
    $region37: #{tpu_custom_call.1} parent=1 // pred_fallthru
      _
    // Predicated region
    $region38: #{tpu_custom_call.1} parent=1 // pred_check
      _
    $region39: #{tpu_custom_call.1} parent=1 // pred_check_branch
      %95 = sbr.rel (0) target = $region41
    $region40: #{tpu_custom_call.1} parent=1 // pred_region
      %97 = vsyncadd [#allocation12], 0
      %s98 = sshll.u32 %s9, 4
      %s99 = int_to_ptr.hbm [resolvable:$true] %s98
      %s100 = sshll.u32 [#allocation11], 4
      %s101 = int_to_ptr.vmem [resolvable:$true] %s100
      %106 = dma.hbm_to_vmem [thread:$0]  %s99, 1024, %s101, [#allocation12], 64, 64, 4
    $region41: #{tpu_custom_call.1} parent=1 // pred_fallthru
      _
    // Predicated region
    $region42: #{tpu_custom_call.1} parent=1 // pred_check
      _
    $region43: #{tpu_custom_call.1} parent=1 // pred_check_branch
      %108 = sbr.rel (0) target = $region45
    $region44: #{tpu_custom_call.1} parent=1 // pred_region
      _
    $region45: #{tpu_custom_call.1} parent=1 // pred_fallthru
      _
    // Predicated region
    $region46: #{tpu_custom_call.1} parent=1 // pred_check
      _
    $region47: #{tpu_custom_call.1} parent=1 // pred_check_branch
      %110 = sbr.rel (0) target = $region49
    $region48: #{tpu_custom_call.1} parent=1 // pred_region
      %112 = dma.done [#allocation3], 128
    $region49: #{tpu_custom_call.1} parent=1 // pred_fallthru
      _
    // Predicated region
    $region50: #{tpu_custom_call.1} parent=1 // pred_check
      _
    $region51: #{tpu_custom_call.1} parent=1 // pred_check_branch
      %114 = sbr.rel (0) target = $region53
    $region52: #{tpu_custom_call.1} parent=1 // pred_region
      %116 = dma.done [#allocation6], 512
    $region53: #{tpu_custom_call.1} parent=1 // pred_fallthru
      _
    // Predicated region
    $region54: #{tpu_custom_call.1} parent=1 // pred_check
      _
    $region55: #{tpu_custom_call.1} parent=1 // pred_check_branch
      %118 = sbr.rel (0) target = $region57
    $region56: #{tpu_custom_call.1} parent=1 // pred_region
      %120 = dma.done [#allocation6], 1024
    $region57: #{tpu_custom_call.1} parent=1 // pred_fallthru
      _
    // Predicated region
    $region58: #{tpu_custom_call.1} parent=1 // pred_check
      _
    $region59: #{tpu_custom_call.1} parent=1 // pred_check_branch
      %122 = sbr.rel (0) target = $region61
    $region60: #{tpu_custom_call.1} parent=1 // pred_region
      %124 = dma.done [#allocation9], 1024
    $region61: #{tpu_custom_call.1} parent=1 // pred_fallthru
      _
    // Predicated region
    $region62: #{tpu_custom_call.1} parent=1 // pred_check
      _
    $region63: #{tpu_custom_call.1} parent=1 // pred_check_branch
      %126 = sbr.rel (0) target = $region65
    $region64: #{tpu_custom_call.1} parent=1 // pred_region
      %128 = dma.done [#allocation9], 1024
    $region65: #{tpu_custom_call.1} parent=1 // pred_fallthru
      _
    // Predicated region
    $region66: #{tpu_custom_call.1} parent=1 // pred_check
      _
    $region67: #{tpu_custom_call.1} parent=1 // pred_check_branch
      %130 = sbr.rel (0) target = $region69
    $region68: #{tpu_custom_call.1} parent=1 // pred_region
      %132 = dma.done [#allocation12], 1024
    $region69: #{tpu_custom_call.1} parent=1 // pred_fallthru
      _
    %v134 = vld [vmem:[#allocation2] sm:$0xf]
    %v135 = vld [vmem:[#allocation2 + $0x4] sm:$0xf]
    %v136 = vld [vmem:[#allocation5] sm:$0xf]
    %v137 = vld [vmem:[#allocation5 + $0x4] sm:$0xf]
    %v138 = vld [vmem:[#allocation5 + $0x8] sm:$0xf]
    %v139 = vld [vmem:[#allocation5 + $0xc] sm:$0xf]
    %v140 = vld [vmem:[#allocation5 + $0x10] sm:$0xf]
    %v141 = vld [vmem:[#allocation5 + $0x14] sm:$0xf]
    %v142 = vld [vmem:[#allocation5 + $0x18] sm:$0xf]
    %v143 = vld [vmem:[#allocation5 + $0x1c] sm:$0xf]
    %v144 = vld [vmem:[%s2] sm:$0x1]
    %v146 = vperm.slane %v144, 0
    %v150 = vunpack.c.l.b16 %v134
    %v151 = vunpack.c.l.b16 %v135
    %v152 = vpack.c.b16 %v151, %v150
    %v161 = vunpack.c.l.b16 %v136
    %v162 = vunpack.c.l.b16 %v137
    %v163 = vunpack.c.l.b16 %v138
    %v164 = vunpack.c.l.b16 %v139
    %v165 = vunpack.c.l.b16 %v140
    %v166 = vunpack.c.l.b16 %v141
    %v167 = vunpack.c.l.b16 %v142
    %v168 = vunpack.c.l.b16 %v143
    %v169 = vpack.c.b16 %v162, %v161
    %v170 = vpack.c.b16 %v164, %v163
    %v171 = vpack.c.b16 %v166, %v165
    %v172 = vpack.c.b16 %v168, %v167
    %vm177 = vcmask 523264
    %v179 = vsel %vm177, %v152, 0
    %181 = vmatpush.bf16.msra.mxu0 0
    %182 = vmatpush.bf16.msra.mxu0 0
    %183 = vmatpush.bf16.msra.mxu0 0
    %184 = vmatpush.bf16.msra.mxu0 0
    %185 = vmatpush.bf16.msra.mxu0 %v172
    %186 = vmatpush.bf16.msra.mxu0 %v171
    %187 = vmatpush.bf16.msra.mxu0 %v170
    %188 = vmatpush.bf16.msra.mxu0 %v169
    %189 = vmatmul.bf16.gmra.mxu0 %v179
    %v190 = vpop.f32.mrf.mxu0
    %v191 = vadd.f32 %v146, %v190
    %v192 = vpop.f32.mrf.mxu0
    %v193 = vadd.f32 %v146, %v192
    %194 = vdwg.mxu0
    %v195 = vmul.f32 %v191, 0.2
    %v196 = vmul.f32 %v193, 0.2
    %v197 = vmax.f32 %v191, %v195
    %v198 = vmax.f32 %v193, %v196
    %v199 = vpack.c.bf16 %v198, %v197
    %v200 = vld [vmem:[#allocation7] sm:$0xf]
    %v201 = vld [vmem:[#allocation7 + $0x4] sm:$0xf]
    %v202 = vld [vmem:[#allocation7 + $0x8] sm:$0xf]
    %v203 = vld [vmem:[#allocation7 + $0xc] sm:$0xf]
    %v204 = vld [vmem:[#allocation7 + $0x10] sm:$0xf]
    %v205 = vld [vmem:[#allocation7 + $0x14] sm:$0xf]
    %v206 = vld [vmem:[#allocation7 + $0x18] sm:$0xf]
    %v207 = vld [vmem:[#allocation7 + $0x1c] sm:$0xf]
    %v208 = vld [vmem:[#allocation7 + $0x20] sm:$0xf]
    %v209 = vld [vmem:[#allocation7 + $0x24] sm:$0xf]
    %v210 = vld [vmem:[#allocation7 + $0x28] sm:$0xf]
    %v211 = vld [vmem:[#allocation7 + $0x2c] sm:$0xf]
    %v212 = vld [vmem:[#allocation7 + $0x30] sm:$0xf]
    %v213 = vld [vmem:[#allocation7 + $0x34] sm:$0xf]
    %v214 = vld [vmem:[#allocation7 + $0x38] sm:$0xf]
    %v215 = vld [vmem:[#allocation7 + $0x3c] sm:$0xf]
    %v216 = vld [vmem:[%s4] sm:$0x1]
    %v218 = vperm.slane %v216, 0
    %v236 = vunpack.c.l.b16 %v200
    %v237 = vunpack.c.l.b16 %v201
    %v238 = vunpack.c.l.b16 %v202
    %v239 = vunpack.c.l.b16 %v203
    %v240 = vunpack.c.l.b16 %v204
    %v241 = vunpack.c.l.b16 %v205
    %v242 = vunpack.c.l.b16 %v206
    %v243 = vunpack.c.l.b16 %v207
    %v244 = vunpack.c.l.b16 %v208
    %v245 = vunpack.c.l.b16 %v209
    %v246 = vunpack.c.l.b16 %v210
    %v247 = vunpack.c.l.b16 %v211
    %v248 = vunpack.c.l.b16 %v212
    %v249 = vunpack.c.l.b16 %v213
    %v250 = vunpack.c.l.b16 %v214
    %v251 = vunpack.c.l.b16 %v215
    %v252 = vpack.c.b16 %v237, %v236
    %v253 = vpack.c.b16 %v239, %v238
    %v254 = vpack.c.b16 %v241, %v240
    %v255 = vpack.c.b16 %v243, %v242
    %v256 = vpack.c.b16 %v245, %v244
    %v257 = vpack.c.b16 %v247, %v246
    %v258 = vpack.c.b16 %v249, %v248
    %v259 = vpack.c.b16 %v251, %v250
    %268 = vmatpush.bf16.msra.mxu0 %v259
    %269 = vmatpush.bf16.msra.mxu0 %v258
    %270 = vmatpush.bf16.msra.mxu0 %v257
    %271 = vmatpush.bf16.msra.mxu0 %v256
    %272 = vmatpush.bf16.msra.mxu0 %v255
    %273 = vmatpush.bf16.msra.mxu0 %v254
    %274 = vmatpush.bf16.msra.mxu0 %v253
    %275 = vmatpush.bf16.msra.mxu0 %v252
    %276 = vmatmul.bf16.gmra.mxu0 %v199
    %v277 = vpop.f32.mrf.mxu0
    %v278 = vadd.f32 %v218, %v277
    %v279 = vpop.f32.mrf.mxu0
    %v280 = vadd.f32 %v218, %v279
    %281 = vdwg.mxu0
    %v282 = vmul.f32 %v278, 0.2
    %v283 = vmul.f32 %v280, 0.2
    %v284 = vmax.f32 %v278, %v282
    %v285 = vmax.f32 %v280, %v283
    %v286 = vpack.c.bf16 %v285, %v284
    %v287 = vld [vmem:[#allocation8] sm:$0xf]
    %v288 = vld [vmem:[#allocation8 + $0x4] sm:$0xf]
    %v289 = vld [vmem:[#allocation8 + $0x8] sm:$0xf]
    %v290 = vld [vmem:[#allocation8 + $0xc] sm:$0xf]
    %v291 = vld [vmem:[#allocation8 + $0x10] sm:$0xf]
    %v292 = vld [vmem:[#allocation8 + $0x14] sm:$0xf]
    %v293 = vld [vmem:[#allocation8 + $0x18] sm:$0xf]
    %v294 = vld [vmem:[#allocation8 + $0x1c] sm:$0xf]
    %v295 = vld [vmem:[#allocation8 + $0x20] sm:$0xf]
    %v296 = vld [vmem:[#allocation8 + $0x24] sm:$0xf]
    %v297 = vld [vmem:[#allocation8 + $0x28] sm:$0xf]
    %v298 = vld [vmem:[#allocation8 + $0x2c] sm:$0xf]
    %v299 = vld [vmem:[#allocation8 + $0x30] sm:$0xf]
    %v300 = vld [vmem:[#allocation8 + $0x34] sm:$0xf]
    %v301 = vld [vmem:[#allocation8 + $0x38] sm:$0xf]
    %v302 = vld [vmem:[#allocation8 + $0x3c] sm:$0xf]
    %v303 = vld [vmem:[%s6] sm:$0x1]
    %v305 = vperm.slane %v303, 0
    %v323 = vunpack.c.l.b16 %v287
    %v324 = vunpack.c.l.b16 %v288
    %v325 = vunpack.c.l.b16 %v289
    %v326 = vunpack.c.l.b16 %v290
    %v327 = vunpack.c.l.b16 %v291
    %v328 = vunpack.c.l.b16 %v292
    %v329 = vunpack.c.l.b16 %v293
    %v330 = vunpack.c.l.b16 %v294
    %v331 = vunpack.c.l.b16 %v295
    %v332 = vunpack.c.l.b16 %v296
    %v333 = vunpack.c.l.b16 %v297
    %v334 = vunpack.c.l.b16 %v298
    %v335 = vunpack.c.l.b16 %v299
    %v336 = vunpack.c.l.b16 %v300
    %v337 = vunpack.c.l.b16 %v301
    %v338 = vunpack.c.l.b16 %v302
    %v339 = vpack.c.b16 %v324, %v323
    %v340 = vpack.c.b16 %v326, %v325
    %v341 = vpack.c.b16 %v328, %v327
    %v342 = vpack.c.b16 %v330, %v329
    %v343 = vpack.c.b16 %v332, %v331
    %v344 = vpack.c.b16 %v334, %v333
    %v345 = vpack.c.b16 %v336, %v335
    %v346 = vpack.c.b16 %v338, %v337
    %355 = vmatpush.bf16.msra.mxu0 %v346
    %356 = vmatpush.bf16.msra.mxu0 %v345
    %357 = vmatpush.bf16.msra.mxu0 %v344
    %358 = vmatpush.bf16.msra.mxu0 %v343
    %359 = vmatpush.bf16.msra.mxu0 %v342
    %360 = vmatpush.bf16.msra.mxu0 %v341
    %361 = vmatpush.bf16.msra.mxu0 %v340
    %362 = vmatpush.bf16.msra.mxu0 %v339
    %363 = vmatmul.bf16.gmra.mxu0 %v286
    %v364 = vpop.f32.mrf.mxu0
    %v365 = vadd.f32 %v305, %v364
    %v366 = vpop.f32.mrf.mxu0
    %v367 = vadd.f32 %v305, %v366
    %368 = vdwg.mxu0
    %v369 = vmul.f32 %v365, 0.2
    %v370 = vmul.f32 %v367, 0.2
    %v371 = vmax.f32 %v365, %v369
    %v372 = vmax.f32 %v367, %v370
    %v373 = vpack.c.bf16 %v372, %v371
    %v374 = vld [vmem:[#allocation10] sm:$0xf]
    %v375 = vld [vmem:[#allocation10 + $0x4] sm:$0xf]
    %v376 = vld [vmem:[#allocation10 + $0x8] sm:$0xf]
    %v377 = vld [vmem:[#allocation10 + $0xc] sm:$0xf]
    %v378 = vld [vmem:[#allocation10 + $0x10] sm:$0xf]
    %v379 = vld [vmem:[#allocation10 + $0x14] sm:$0xf]
    %v380 = vld [vmem:[#allocation10 + $0x18] sm:$0xf]
    %v381 = vld [vmem:[#allocation10 + $0x1c] sm:$0xf]
    %v382 = vld [vmem:[#allocation10 + $0x20] sm:$0xf]
    %v383 = vld [vmem:[#allocation10 + $0x24] sm:$0xf]
    %v384 = vld [vmem:[#allocation10 + $0x28] sm:$0xf]
    %v385 = vld [vmem:[#allocation10 + $0x2c] sm:$0xf]
    %v386 = vld [vmem:[#allocation10 + $0x30] sm:$0xf]
    %v387 = vld [vmem:[#allocation10 + $0x34] sm:$0xf]
    %v388 = vld [vmem:[#allocation10 + $0x38] sm:$0xf]
    %v389 = vld [vmem:[#allocation10 + $0x3c] sm:$0xf]
    %v390 = vld [vmem:[%s8] sm:$0x1]
    %v392 = vperm.slane %v390, 0
    %v410 = vunpack.c.l.b16 %v374
    %v411 = vunpack.c.l.b16 %v375
    %v412 = vunpack.c.l.b16 %v376
    %v413 = vunpack.c.l.b16 %v377
    %v414 = vunpack.c.l.b16 %v378
    %v415 = vunpack.c.l.b16 %v379
    %v416 = vunpack.c.l.b16 %v380
    %v417 = vunpack.c.l.b16 %v381
    %v418 = vunpack.c.l.b16 %v382
    %v419 = vunpack.c.l.b16 %v383
    %v420 = vunpack.c.l.b16 %v384
    %v421 = vunpack.c.l.b16 %v385
    %v422 = vunpack.c.l.b16 %v386
    %v423 = vunpack.c.l.b16 %v387
    %v424 = vunpack.c.l.b16 %v388
    %v425 = vunpack.c.l.b16 %v389
    %v426 = vpack.c.b16 %v411, %v410
    %v427 = vpack.c.b16 %v413, %v412
    %v428 = vpack.c.b16 %v415, %v414
    %v429 = vpack.c.b16 %v417, %v416
    %v430 = vpack.c.b16 %v419, %v418
    %v431 = vpack.c.b16 %v421, %v420
    %v432 = vpack.c.b16 %v423, %v422
    %v433 = vpack.c.b16 %v425, %v424
    %442 = vmatpush.bf16.msra.mxu0 %v433
    %443 = vmatpush.bf16.msra.mxu0 %v432
    %444 = vmatpush.bf16.msra.mxu0 %v431
    %445 = vmatpush.bf16.msra.mxu0 %v430
    %446 = vmatpush.bf16.msra.mxu0 %v429
    %447 = vmatpush.bf16.msra.mxu0 %v428
    %448 = vmatpush.bf16.msra.mxu0 %v427
    %449 = vmatpush.bf16.msra.mxu0 %v426
    %450 = vmatmul.bf16.gmra.mxu0 %v373
    %v451 = vpop.f32.mrf.mxu0
    %v452 = vadd.f32 %v392, %v451
    %v453 = vpop.f32.mrf.mxu0
    %v454 = vadd.f32 %v392, %v453
    %455 = vdwg.mxu0
    %v456 = vmul.f32 %v452, 0.2
    %v457 = vmul.f32 %v454, 0.2
    %v458 = vmax.f32 %v452, %v456
    %v459 = vmax.f32 %v454, %v457
    %v460 = vpack.c.bf16 %v459, %v458
    %v461 = vld [vmem:[#allocation11] sm:$0xf]
    %v462 = vld [vmem:[#allocation11 + $0x4] sm:$0xf]
    %v463 = vld [vmem:[#allocation11 + $0x8] sm:$0xf]
    %v464 = vld [vmem:[#allocation11 + $0xc] sm:$0xf]
    %v465 = vld [vmem:[#allocation11 + $0x10] sm:$0xf]
    %v466 = vld [vmem:[#allocation11 + $0x14] sm:$0xf]
    %v467 = vld [vmem:[#allocation11 + $0x18] sm:$0xf]
    %v468 = vld [vmem:[#allocation11 + $0x1c] sm:$0xf]
    %v469 = vld [vmem:[#allocation11 + $0x20] sm:$0xf]
    %v470 = vld [vmem:[#allocation11 + $0x24] sm:$0xf]
    %v471 = vld [vmem:[#allocation11 + $0x28] sm:$0xf]
    %v472 = vld [vmem:[#allocation11 + $0x2c] sm:$0xf]
    %v473 = vld [vmem:[#allocation11 + $0x30] sm:$0xf]
    %v474 = vld [vmem:[#allocation11 + $0x34] sm:$0xf]
    %v475 = vld [vmem:[#allocation11 + $0x38] sm:$0xf]
    %v476 = vld [vmem:[#allocation11 + $0x3c] sm:$0xf]
    %v477 = vld [vmem:[%s10] sm:$0x1]
    %v479 = vperm.slane %v477, 0
    %v497 = vunpack.c.l.b16 %v461
    %v498 = vunpack.c.l.b16 %v462
    %v499 = vunpack.c.l.b16 %v463
    %v500 = vunpack.c.l.b16 %v464
    %v501 = vunpack.c.l.b16 %v465
    %v502 = vunpack.c.l.b16 %v466
    %v503 = vunpack.c.l.b16 %v467
    %v504 = vunpack.c.l.b16 %v468
    %v505 = vunpack.c.l.b16 %v469
    %v506 = vunpack.c.l.b16 %v470
    %v507 = vunpack.c.l.b16 %v471
    %v508 = vunpack.c.l.b16 %v472
    %v509 = vunpack.c.l.b16 %v473
    %v510 = vunpack.c.l.b16 %v474
    %v511 = vunpack.c.l.b16 %v475
    %v512 = vunpack.c.l.b16 %v476
    %v513 = vpack.c.b16 %v498, %v497
    %v514 = vpack.c.b16 %v500, %v499
    %v515 = vpack.c.b16 %v502, %v501
    %v516 = vpack.c.b16 %v504, %v503
    %v517 = vpack.c.b16 %v506, %v505
    %v518 = vpack.c.b16 %v508, %v507
    %v519 = vpack.c.b16 %v510, %v509
    %v520 = vpack.c.b16 %v512, %v511
    %529 = vmatpush.bf16.msra.mxu0 %v520
    %530 = vmatpush.bf16.msra.mxu0 %v519
    %531 = vmatpush.bf16.msra.mxu0 %v518
    %532 = vmatpush.bf16.msra.mxu0 %v517
    %533 = vmatpush.bf16.msra.mxu0 %v516
    %534 = vmatpush.bf16.msra.mxu0 %v515
    %535 = vmatpush.bf16.msra.mxu0 %v514
    %536 = vmatpush.bf16.msra.mxu0 %v513
    %537 = vmatmul.bf16.gmra.mxu0 %v460
    %v538 = vpop.f32.mrf.mxu0
    %v539 = vadd.f32 %v479, %v538
    %v540 = vpop.f32.mrf.mxu0
    %v541 = vadd.f32 %v479, %v540
    %542 = vdwg.mxu0
    %543 = vst [vmem:[#allocation13] sm:$0xff] %v539
    %544 = vst [vmem:[#allocation13 + $0x8] sm:$0xff] %v541
    // Predicated region
    $region70: #{tpu_custom_call.1} parent=1 // pred_check
      _
    $region71: #{tpu_custom_call.1} parent=1 // pred_check_branch
      %546 = sbr.rel (0) target = $region73
    $region72: #{tpu_custom_call.1} parent=1 // pred_region
      %548 = vsyncadd [#allocation4], 0
      %s549 = sshll.u32 [#allocation13], 4
      %s550 = int_to_ptr.vmem [resolvable:$true] %s549
      %s551 = sshll.u32 %s11, 4
      %s552 = int_to_ptr.hbm [resolvable:$true] %s551
      %557 = dma.vmem_to_hbm [thread:$0]  %s550, 256, %s552, [#allocation4], 128, 128, 8
    $region73: #{tpu_custom_call.1} parent=1 // pred_fallthru
      _
    // Predicated region
    $region74: #{tpu_custom_call.1} parent=1 // pred_check
      _
    $region75: #{tpu_custom_call.1} parent=1 // pred_check_branch
      %559 = sbr.rel (0) target = $region77
    $region76: #{tpu_custom_call.1} parent=1 // pred_region
      %561 = dma.done [#allocation4], 256
    $region77: #{tpu_custom_call.1} parent=1 // pred_fallthru
      _
    %562 = vsyncpa [#allocation3], 1
    %563 = vsyncpa [#allocation6], 1
    %564 = vsyncpa [#allocation9], 1
    %565 = vsyncpa [#allocation12], 1
    %566 = vsyncpa [#allocation4], 1

</llo_original>
